<compile_context>
chip_gen: v7x
topology: tpu7x:2x2x1
jax: 0.10.0
libtpu: 0.0.40
codegen_flags: <defaults>
</compile_context>

<pallas_src>
import jax
import jax.numpy as jnp
import numpy as np
from jax import lax
from jax.experimental import pallas as pl
from jax.experimental.pallas import tpu as pltpu

# ---- hyperparameters (stand-ins for json_train[...] in the original script) ----
CONV_1_IF = 4     # conv_1_if
CONV_1_KS = 3     # conv_1_ks
CONV_1_OF = 8     # conv_1_of
CONV_2_IF = 8     # conv_2_if (== conv_1_of)
CONV_2_KS = 3     # conv_2_ks
CONV_2_OF = 8     # conv_2_of
POOL_KS   = 2     # pool_ks
IN_W      = 16    # input width (H == 1)
BATCH     = 2

_W1  = IN_W - CONV_1_KS + 1          # width after conv1           = 14
_WQ1 = _W1 // POOL_KS                # width after pool1           = 7
_W2  = _WQ1 - CONV_2_KS + 1          # width after conv2           = 5
_WQ2 = _W2 // POOL_KS                # width after pool2           = 2

FULLY_1_INDIM  = CONV_2_OF * 1 * _WQ2   # fully_1_indim  (flatten of (C,1,W)) = 16
FULLY_1_OUTDIM = 32                     # fully_1_outdim
FULLY_2_INDIM  = FULLY_1_OUTDIM         # fully_2_indim
FULLY_2_OUTDIM = 4                      # fully_2_outdim


def make_net_kernel(N, W, Cin, K1, C1, K2, C2, P, WQ1, W2, WQ2, F1, F2):
    """Whole-net kernel.  Row space: sample n occupies strided rows with
    per-sample stride WH = W // P after the fused conv1+pool1 stage."""
    WH = W // P                    # per-sample row stride in the pooled slab
    L1 = (N - 1) * WH + WQ1        # rows of pooled-conv1 slab (last sample not padded)
    R2 = L1 - K2 + 1               # conv2 rows (incl. cross-sample garbage rows)
    RM = R2 - P + 1                # rows of the sliding pool2 max

    def kernel(x_ref, w1_ref, w2_ref, fc1_ref, fc2_ref, out_ref, m2_ref):
        # x_ref:   (N*W, Cin)   flat channel-last input rows (row = n*W + w)
        # w1_ref:  (K1*Cin, C1) conv1 weight, rows ordered (k, c)
        # w2_ref:  (K2*C1, C2)  conv2 weight, rows ordered (k, c)
        # fc1_ref: (WQ2*C2, F1) fc1 weight, rows ordered (q, c) (absorbs flatten order)
        # fc2_ref: (F1, F2)     fc2 weight, pre-transposed
        # out_ref: (N, F2)
        # m2_ref:  (RM, C2)     VMEM scratch for the pooled conv2 slab

        # ---- conv1 + ReLU + maxpool1, fused ------------------------------------
        # Strided loads fold the K1 im2col taps AND the pool stride/phase:
        #   x_ref[pl.ds(ph+k, L1, stride=P)][i] = x[n, g*P + ph + k, :] for i = n*WH + g.
        # P accumulations of K1 dots; phase-max; single ReLU (max/ReLU commute).
        p1 = None
        for ph in range(P):
            acc = None
            for k in range(K1):
                xs = x_ref[pl.ds(ph + k, L1, stride=P), :]                    # (L1, Cin)
                d = jnp.dot(xs, w1_ref[k * Cin:(k + 1) * Cin, :],
                            preferred_element_type=jnp.float32)               # (L1, C1)
                acc = d if acc is None else acc + d
            p1 = acc if p1 is None else jnp.maximum(p1, acc)
        p1 = jnp.maximum(p1, 0.0)                                             # (L1, C1)

        # ---- conv2 + ReLU: K2 accumulated dots on shifted slabs ----------------
        # Rows with w2 >= W2 are cross-sample garbage, computed but never read.
        r2 = None
        for k in range(K2):
            d = jnp.dot(p1[k:k + R2, :], w2_ref[k * C1:(k + 1) * C1, :],
                        preferred_element_type=jnp.float32)                   # (R2, C2)
            r2 = d if r2 is None else r2 + d
        r2 = jnp.maximum(r2, 0.0)                                             # (R2, C2)

        # ---- maxpool2: sliding max of P shifted slabs --------------------------
        m2 = r2[0:RM, :]
        for j in range(1, P):
            m2 = jnp.maximum(m2, r2[j:j + RM, :])                             # (RM, C2)

        # ---- flatten + fc1 + ReLU + fc2 ----------------------------------------
        # Stage the pooled slab in VMEM scratch, then fold the row gather into
        # fc1 as WQ2 accumulated dots on strided reads (valid window rows sit at
        # n*WH + q*P).  PyTorch's channel-major flatten order lives in fc1_ref.
        m2_ref[...] = m2
        h = None
        for q in range(WQ2):
            rows = m2_ref[pl.ds(q * P, N, stride=WH), :]                      # (N, C2)
            d = jnp.dot(rows, fc1_ref[q * C2:(q + 1) * C2, :],
                        preferred_element_type=jnp.float32)                   # (N, F1)
            h = d if h is None else h + d
        h = jnp.maximum(h, 0.0)
        # TODO(synk): at scaled batch, emit this store lane-dense (transposed) and
        # cast dot operands to bf16 on v6e/v7x; at N=2 it is pure overhead.
        out_ref[...] = jnp.dot(h, fc2_ref[...],
                               preferred_element_type=jnp.float32)            # (N, F2)

    return kernel, RM


def prepare_params(conv1_w, conv2_w, fc1_w, fc2_w, pool_ks=POOL_KS):
    """One-time (parameter-load-time) weight re-layout — hoisted out of the
    per-call forward so no transpose/reshape XLA ops run per inference."""
    C1, Cin, _, K1 = conv1_w.shape
    C2, C1b, _, K2 = conv2_w.shape
    F1, fin1 = fc1_w.shape
    F2, fin2 = fc2_w.shape
    assert C1b == C1 and fin2 == F1
    WQ2 = fin1 // C2
    f32 = jnp.float32
    w1_col = jnp.transpose(conv1_w[:, :, 0, :], (2, 1, 0)).reshape(K1 * Cin, C1).astype(f32)
    w2_col = jnp.transpose(conv2_w[:, :, 0, :], (2, 1, 0)).reshape(K2 * C1, C2).astype(f32)
    # PyTorch flatten(1) of (N, C2, 1, WQ2) indexes as c*WQ2 + q; kernel rows are (q, c)
    fc1_k = jnp.transpose(fc1_w.reshape(F1, C2, WQ2), (2, 1, 0)).reshape(WQ2 * C2, F1).astype(f32)
    fc2_t = jnp.transpose(fc2_w).astype(f32)                                  # (F1, F2)
    dims = dict(Cin=Cin, K1=K1, C1=C1, K2=K2, C2=C2, F1=F1, F2=F2, P=pool_ks)
    return dict(w1=w1_col, w2=w2_col, fc1=fc1_k, fc2=fc2_t, dims=dims)


def net_forward_pallas(x_nchw, params):
    """Forward pass matching the PyTorch module.  x_nchw: (N, Cin, 1, W) float32."""
    d = params['dims']
    Cin, K1, C1 = d['Cin'], d['K1'], d['C1']
    K2, C2, F1, F2, P = d['K2'], d['C2'], d['F1'], d['F2'], d['P']
    N, Cin_x, H, W = x_nchw.shape
    assert H == 1, "module uses (1, ks) kernels: expects H == 1"
    assert Cin_x == Cin
    assert W % P == 0, "fused conv1/pool1 strided loads assume W % pool_ks == 0"
    W1 = W - K1 + 1
    WQ1 = W1 // P
    W2 = WQ1 - K2 + 1
    WQ2 = W2 // P
    assert WQ2 * C2 == params['fc1'].shape[0]

    # Only per-call relayout: NCHW -> flat (N*W, Cin) channel-last rows.
    # Pure layout, O(input) bytes (no K1*P im2col blow-up written to HBM).
    x_rows = jnp.transpose(x_nchw[:, :, 0, :], (0, 2, 1)).reshape(N * W, Cin).astype(jnp.float32)

    kernel, RM = make_net_kernel(N, W, Cin, K1, C1, K2, C2, P, WQ1, W2, WQ2, F1, F2)
    vmem = pl.BlockSpec(memory_space=pltpu.MemorySpace.VMEM)
    return pl.pallas_call(
        kernel,
        out_shape=jax.ShapeDtypeStruct((N, F2), jnp.float32),
        in_specs=[vmem, vmem, vmem, vmem, vmem],
        out_specs=vmem,
        scratch_shapes=[pltpu.VMEM((RM, C2), jnp.float32)],
    )(x_rows, params['w1'], params['w2'], params['fc1'], params['fc2'])


def net_forward_ref(x, conv1_w, conv2_w, fc1_w, fc2_w, pool_ks=POOL_KS):
    """Pure-JAX NCHW reference (mirrors the PyTorch forward) for validation."""
    dn1 = lax.conv_dimension_numbers(x.shape, conv1_w.shape, ('NCHW', 'OIHW', 'NCHW'))
    y = lax.conv_general_dilated(x, conv1_w, (1, 1), 'VALID', dimension_numbers=dn1,
                                 precision=lax.Precision.HIGHEST)
    y = jnp.maximum(y, 0.0)
    y = lax.reduce_window(y, -jnp.inf, lax.max,
                          (1, 1, 1, pool_ks), (1, 1, 1, pool_ks), 'VALID')
    dn2 = lax.conv_dimension_numbers(y.shape, conv2_w.shape, ('NCHW', 'OIHW', 'NCHW'))
    y = lax.conv_general_dilated(y, conv2_w, (1, 1), 'VALID', dimension_numbers=dn2,
                                 precision=lax.Precision.HIGHEST)
    y = jnp.maximum(y, 0.0)
    y = lax.reduce_window(y, -jnp.inf, lax.max,
                          (1, 1, 1, pool_ks), (1, 1, 1, pool_ks), 'VALID')
    y = y.reshape(y.shape[0], -1)                       # flatten(1), channel-major
    y = jnp.maximum(jnp.dot(y, fc1_w.T, precision=lax.Precision.HIGHEST), 0.0)
    return jnp.dot(y, fc2_w.T, precision=lax.Precision.HIGHEST)


if __name__ == "__main__":
    key = jax.random.PRNGKey(0)
    k1, k2, k3, k4, k5 = jax.random.split(key, 5)

    # Deterministic synthetic parameters (shapes follow the module's __init__).
    x = jax.random.normal(k1, (BATCH, CONV_1_IF, 1, IN_W), jnp.float32)
    conv1_w = 0.2 * jax.random.normal(k2, (CONV_1_OF, CONV_1_IF, 1, CONV_1_KS), jnp.float32)
    conv2_w = 0.2 * jax.random.normal(k3, (CONV_2_OF, CONV_2_IF, 1, CONV_2_KS), jnp.float32)
    fc1_w = 0.2 * jax.random.normal(k4, (FULLY_1_OUTDIM, FULLY_1_INDIM), jnp.float32)
    fc2_w = 0.2 * jax.random.normal(k5, (FULLY_2_OUTDIM, FULLY_2_INDIM), jnp.float32)

    # Parameter-load-time weight prep (run once, reused across forwards).
    params = jax.tree_util.tree_map(
        lambda a: jax.block_until_ready(a) if isinstance(a, jax.Array) else a,
        prepare_params(conv1_w, conv2_w, fc1_w, fc2_w))

    out = net_forward_pallas(x, params)
    out = jax.block_until_ready(out)

    ref = net_forward_ref(x, conv1_w, conv2_w, fc1_w, fc2_w)
    # Tolerance accommodates the MXU's default (non-HIGHEST) f32 matmul precision.
    np.testing.assert_allclose(np.asarray(out), np.asarray(ref), rtol=1e-2, atol=1e-2)
    print("KERNEL_OK")
</pallas_src>

<mosaic_0001>
module attributes {stable_mosaic.version = 11 : i64} {
  func.func @kernel(%arg0: memref<32x4xf32, #tpu.memory_space<vmem>>, %arg1: memref<12x8xf32, #tpu.memory_space<vmem>>, %arg2: memref<24x8xf32, #tpu.memory_space<vmem>>, %arg3: memref<16x32xf32, #tpu.memory_space<vmem>>, %arg4: memref<32x4xf32, #tpu.memory_space<vmem>>, %arg5: memref<2x4xf32, #tpu.memory_space<vmem>>, %arg6: memref<12x8xf32, #tpu.memory_space<vmem>>) attributes {dimension_semantics = [], scalar_prefetch = 0 : i64, scratch_operands = 1 : i64, tpu.core_type = #tpu.core_type<tc>} {
    %c0 = arith.constant 0 : index
    %c0_0 = arith.constant 0 : index
    %0 = tpu.strided_load %arg0[%c0, %c0_0] {strides = array<i32: 2, 1>} : memref<32x4xf32, #tpu.memory_space<vmem>>, vector<15x4xf32>
    %c0_1 = arith.constant 0 : index
    %c0_2 = arith.constant 0 : index
    %1 = vector.load %arg1[%c0_1, %c0_2] : memref<12x8xf32, #tpu.memory_space<vmem>>, vector<4x8xf32>
    %cst = arith.constant dense<0.000000e+00> : vector<15x8xf32>
    %2 = tpu.matmul %0, %1, %cst {dimension_numbers = #tpu.dot_dimension_numbers<[1], [0], [0], [1], [0, 0, 1, 1], [], []>} : vector<15x4xf32>, vector<4x8xf32>, vector<15x8xf32> -> vector<15x8xf32>
    %c1 = arith.constant 1 : index
    %c0_3 = arith.constant 0 : index
    %3 = tpu.strided_load %arg0[%c1, %c0_3] {strides = array<i32: 2, 1>} : memref<32x4xf32, #tpu.memory_space<vmem>>, vector<15x4xf32>
    %c4 = arith.constant 4 : index
    %c0_4 = arith.constant 0 : index
    %4 = vector.load %arg1[%c4, %c0_4] : memref<12x8xf32, #tpu.memory_space<vmem>>, vector<4x8xf32>
    %cst_5 = arith.constant dense<0.000000e+00> : vector<15x8xf32>
    %5 = tpu.matmul %3, %4, %cst_5 {dimension_numbers = #tpu.dot_dimension_numbers<[1], [0], [0], [1], [0, 0, 1, 1], [], []>} : vector<15x4xf32>, vector<4x8xf32>, vector<15x8xf32> -> vector<15x8xf32>
    %6 = arith.addf %2, %5 : vector<15x8xf32>
    %c2 = arith.constant 2 : index
    %c0_6 = arith.constant 0 : index
    %7 = tpu.strided_load %arg0[%c2, %c0_6] {strides = array<i32: 2, 1>} : memref<32x4xf32, #tpu.memory_space<vmem>>, vector<15x4xf32>
    %c8 = arith.constant 8 : index
    %c0_7 = arith.constant 0 : index
    %8 = vector.load %arg1[%c8, %c0_7] : memref<12x8xf32, #tpu.memory_space<vmem>>, vector<4x8xf32>
    %cst_8 = arith.constant dense<0.000000e+00> : vector<15x8xf32>
    %9 = tpu.matmul %7, %8, %cst_8 {dimension_numbers = #tpu.dot_dimension_numbers<[1], [0], [0], [1], [0, 0, 1, 1], [], []>} : vector<15x4xf32>, vector<4x8xf32>, vector<15x8xf32> -> vector<15x8xf32>
    %10 = arith.addf %6, %9 : vector<15x8xf32>
    %c1_9 = arith.constant 1 : index
    %c0_10 = arith.constant 0 : index
    %11 = tpu.strided_load %arg0[%c1_9, %c0_10] {strides = array<i32: 2, 1>} : memref<32x4xf32, #tpu.memory_space<vmem>>, vector<15x4xf32>
    %c0_11 = arith.constant 0 : index
    %c0_12 = arith.constant 0 : index
    %12 = vector.load %arg1[%c0_11, %c0_12] : memref<12x8xf32, #tpu.memory_space<vmem>>, vector<4x8xf32>
    %cst_13 = arith.constant dense<0.000000e+00> : vector<15x8xf32>
    %13 = tpu.matmul %11, %12, %cst_13 {dimension_numbers = #tpu.dot_dimension_numbers<[1], [0], [0], [1], [0, 0, 1, 1], [], []>} : vector<15x4xf32>, vector<4x8xf32>, vector<15x8xf32> -> vector<15x8xf32>
    %c2_14 = arith.constant 2 : index
    %c0_15 = arith.constant 0 : index
    %14 = tpu.strided_load %arg0[%c2_14, %c0_15] {strides = array<i32: 2, 1>} : memref<32x4xf32, #tpu.memory_space<vmem>>, vector<15x4xf32>
    %c4_16 = arith.constant 4 : index
    %c0_17 = arith.constant 0 : index
    %15 = vector.load %arg1[%c4_16, %c0_17] : memref<12x8xf32, #tpu.memory_space<vmem>>, vector<4x8xf32>
    %cst_18 = arith.constant dense<0.000000e+00> : vector<15x8xf32>
    %16 = tpu.matmul %14, %15, %cst_18 {dimension_numbers = #tpu.dot_dimension_numbers<[1], [0], [0], [1], [0, 0, 1, 1], [], []>} : vector<15x4xf32>, vector<4x8xf32>, vector<15x8xf32> -> vector<15x8xf32>
    %17 = arith.addf %13, %16 : vector<15x8xf32>
    %c3 = arith.constant 3 : index
    %c0_19 = arith.constant 0 : index
    %18 = tpu.strided_load %arg0[%c3, %c0_19] {strides = array<i32: 2, 1>} : memref<32x4xf32, #tpu.memory_space<vmem>>, vector<15x4xf32>
    %c8_20 = arith.constant 8 : index
    %c0_21 = arith.constant 0 : index
    %19 = vector.load %arg1[%c8_20, %c0_21] : memref<12x8xf32, #tpu.memory_space<vmem>>, vector<4x8xf32>
    %cst_22 = arith.constant dense<0.000000e+00> : vector<15x8xf32>
    %20 = tpu.matmul %18, %19, %cst_22 {dimension_numbers = #tpu.dot_dimension_numbers<[1], [0], [0], [1], [0, 0, 1, 1], [], []>} : vector<15x4xf32>, vector<4x8xf32>, vector<15x8xf32> -> vector<15x8xf32>
    %21 = arith.addf %17, %20 : vector<15x8xf32>
    %22 = arith.maximumf %10, %21 : vector<15x8xf32>
    %cst_23 = arith.constant 0.000000e+00 : f32
    %23 = vector.broadcast %cst_23 : f32 to vector<15x8xf32>
    %24 = arith.maximumf %22, %23 : vector<15x8xf32>
    %25 = vector.extract_strided_slice %24 {offsets = [0, 0], sizes = [13, 8], strides = [1, 1]} : vector<15x8xf32> to vector<13x8xf32>
    %c0_24 = arith.constant 0 : index
    %c0_25 = arith.constant 0 : index
    %26 = vector.load %arg2[%c0_24, %c0_25] : memref<24x8xf32, #tpu.memory_space<vmem>>, vector<8x8xf32>
    %cst_26 = arith.constant dense<0.000000e+00> : vector<13x8xf32>
    %27 = tpu.matmul %25, %26, %cst_26 {dimension_numbers = #tpu.dot_dimension_numbers<[1], [0], [0], [1], [0, 0, 1, 1], [], []>} : vector<13x8xf32>, vector<8x8xf32>, vector<13x8xf32> -> vector<13x8xf32>
    %28 = vector.extract_strided_slice %24 {offsets = [1, 0], sizes = [13, 8], strides = [1, 1]} : vector<15x8xf32> to vector<13x8xf32>
    %c8_27 = arith.constant 8 : index
    %c0_28 = arith.constant 0 : index
    %29 = vector.load %arg2[%c8_27, %c0_28] : memref<24x8xf32, #tpu.memory_space<vmem>>, vector<8x8xf32>
    %cst_29 = arith.constant dense<0.000000e+00> : vector<13x8xf32>
    %30 = tpu.matmul %28, %29, %cst_29 {dimension_numbers = #tpu.dot_dimension_numbers<[1], [0], [0], [1], [0, 0, 1, 1], [], []>} : vector<13x8xf32>, vector<8x8xf32>, vector<13x8xf32> -> vector<13x8xf32>
    %31 = arith.addf %27, %30 : vector<13x8xf32>
    %32 = vector.extract_strided_slice %24 {offsets = [2, 0], sizes = [13, 8], strides = [1, 1]} : vector<15x8xf32> to vector<13x8xf32>
    %c16 = arith.constant 16 : index
    %c0_30 = arith.constant 0 : index
    %33 = vector.load %arg2[%c16, %c0_30] : memref<24x8xf32, #tpu.memory_space<vmem>>, vector<8x8xf32>
    %cst_31 = arith.constant dense<0.000000e+00> : vector<13x8xf32>
    %34 = tpu.matmul %32, %33, %cst_31 {dimension_numbers = #tpu.dot_dimension_numbers<[1], [0], [0], [1], [0, 0, 1, 1], [], []>} : vector<13x8xf32>, vector<8x8xf32>, vector<13x8xf32> -> vector<13x8xf32>
    %35 = arith.addf %31, %34 : vector<13x8xf32>
    %cst_32 = arith.constant 0.000000e+00 : f32
    %36 = vector.broadcast %cst_32 : f32 to vector<13x8xf32>
    %37 = arith.maximumf %35, %36 : vector<13x8xf32>
    %38 = vector.extract_strided_slice %37 {offsets = [0, 0], sizes = [12, 8], strides = [1, 1]} : vector<13x8xf32> to vector<12x8xf32>
    %39 = vector.extract_strided_slice %37 {offsets = [1, 0], sizes = [12, 8], strides = [1, 1]} : vector<13x8xf32> to vector<12x8xf32>
    %40 = arith.maximumf %38, %39 : vector<12x8xf32>
    %c0_33 = arith.constant 0 : index
    %c0_34 = arith.constant 0 : index
    %41 = vector.load %arg6[%c0_33, %c0_34] : memref<12x8xf32, #tpu.memory_space<vmem>>, vector<12x8xf32>
    tpu.vector_store %arg6[%c0_33, %c0_34], %40 {strides = array<i32>} : memref<12x8xf32, #tpu.memory_space<vmem>>, vector<12x8xf32>,
    %c0_35 = arith.constant 0 : index
    %c0_36 = arith.constant 0 : index
    %42 = tpu.strided_load %arg6[%c0_35, %c0_36] {strides = array<i32: 8, 1>} : memref<12x8xf32, #tpu.memory_space<vmem>>, vector<2x8xf32>
    %c0_37 = arith.constant 0 : index
    %c0_38 = arith.constant 0 : index
    %43 = vector.load %arg3[%c0_37, %c0_38] : memref<16x32xf32, #tpu.memory_space<vmem>>, vector<8x32xf32>
    %cst_39 = arith.constant dense<0.000000e+00> : vector<2x32xf32>
    %44 = tpu.matmul %42, %43, %cst_39 {dimension_numbers = #tpu.dot_dimension_numbers<[1], [0], [0], [1], [0, 0, 1, 1], [], []>} : vector<2x8xf32>, vector<8x32xf32>, vector<2x32xf32> -> vector<2x32xf32>
    %c2_40 = arith.constant 2 : index
    %c0_41 = arith.constant 0 : index
    %45 = tpu.strided_load %arg6[%c2_40, %c0_41] {strides = array<i32: 8, 1>} : memref<12x8xf32, #tpu.memory_space<vmem>>, vector<2x8xf32>
    %c8_42 = arith.constant 8 : index
    %c0_43 = arith.constant 0 : index
    %46 = vector.load %arg3[%c8_42, %c0_43] : memref<16x32xf32, #tpu.memory_space<vmem>>, vector<8x32xf32>
    %cst_44 = arith.constant dense<0.000000e+00> : vector<2x32xf32>
    %47 = tpu.matmul %45, %46, %cst_44 {dimension_numbers = #tpu.dot_dimension_numbers<[1], [0], [0], [1], [0, 0, 1, 1], [], []>} : vector<2x8xf32>, vector<8x32xf32>, vector<2x32xf32> -> vector<2x32xf32>
    %48 = arith.addf %44, %47 : vector<2x32xf32>
    %cst_45 = arith.constant 0.000000e+00 : f32
    %49 = vector.broadcast %cst_45 : f32 to vector<2x32xf32>
    %50 = arith.maximumf %48, %49 : vector<2x32xf32>
    %c0_46 = arith.constant 0 : index
    %c0_47 = arith.constant 0 : index
    %51 = vector.load %arg4[%c0_46, %c0_47] : memref<32x4xf32, #tpu.memory_space<vmem>>, vector<32x4xf32>
    %cst_48 = arith.constant dense<0.000000e+00> : vector<2x4xf32>
    %52 = tpu.matmul %50, %51, %cst_48 {dimension_numbers = #tpu.dot_dimension_numbers<[1], [0], [0], [1], [0, 0, 1, 1], [], []>} : vector<2x32xf32>, vector<32x4xf32>, vector<2x4xf32> -> vector<2x4xf32>
    %c0_49 = arith.constant 0 : index
    %c0_50 = arith.constant 0 : index
    %53 = vector.load %arg5[%c0_49, %c0_50] : memref<2x4xf32, #tpu.memory_space<vmem>>, vector<2x4xf32>
    tpu.vector_store %arg5[%c0_49, %c0_50], %52 {strides = array<i32>} : memref<2x4xf32, #tpu.memory_space<vmem>>, vector<2x4xf32>,
    return
  }
}

</mosaic_0001>

<llo_original>
// kernel: tpu_custom_call.1
$region0: #{tpu_custom_call.1}
  #allocation0 [shape = 'u32[]', space=smem, size = 0x4, offset = 0x4, fixed_abs, tag = 'smem constant byte address 0x4 - core index']
  #allocation1 [shape = 'u32[144,128]{1,0:T(1,128)}', space=vmem, size = 0x12000, scoped, tag = 'internal scratch']
  #allocation2 [shape = 'f32[12,8]{1,0:T(8,128)}', space=vmem, size = 0x2000, scoped, tag = 'scratch operand']
  %s0 = inlined_call_operand.vmem [shape: f32[32,4], index: 0, kind: input, shape index: {}]
  %s1 = inlined_call_operand.vmem [shape: f32[12,8], index: 1, kind: input, shape index: {}]
  %s2 = inlined_call_operand.vmem [shape: f32[24,8], index: 2, kind: input, shape index: {}]
  %s3 = inlined_call_operand.vmem [shape: f32[16,32], index: 3, kind: input, shape index: {}]
  %s4 = inlined_call_operand.vmem [shape: f32[32,4], index: 4, kind: input, shape index: {}]
  %s5 = inlined_call_operand.hbm [shape: f32[2,4], index: 5, kind: output, shape index: {}]
  %s6 = sld [smem:[#allocation0]]
  $region30: #{tpu_custom_call.1} parent=0
    _
  %s8 = ssub.s32 1, %s6
  %s9 = scalar_select 0, %s8, %s6
  $region1: #{tpu_custom_call.1} parent=0
    #allocation3 [shape = 'u8[1024]{0}', space=vmem, size = 0x400, scoped, tag = 'output window, operand 0, single buffered']
    #allocation4 [shape = 's32[1]{0}', space=sflag, size = 0x4, scoped, tag = 'scoped memory for tpu_custom_call.1']
    %10 = vsyncpa [#allocation4], 0
    // Predicated region
    $region2: #{tpu_custom_call.1} parent=1 // pred_check
      _
    $region3: #{tpu_custom_call.1} parent=1 // pred_check_branch
      %12 = sbr.rel (0) target = $region5
    $region4: #{tpu_custom_call.1} parent=1 // pred_region
      _
    $region5: #{tpu_custom_call.1} parent=1 // pred_fallthru
      _
    // Predicated region
    $region6: #{tpu_custom_call.1} parent=1 // pred_check
      _
    $region7: #{tpu_custom_call.1} parent=1 // pred_check_branch
      %14 = sbr.rel (0) target = $region9
    $region8: #{tpu_custom_call.1} parent=1 // pred_region
      _
    $region9: #{tpu_custom_call.1} parent=1 // pred_fallthru
      _
    // Predicated region
    $region10: #{tpu_custom_call.1} parent=1 // pred_check
      _
    $region11: #{tpu_custom_call.1} parent=1 // pred_check_branch
      %16 = sbr.rel (0) target = $region13
    $region12: #{tpu_custom_call.1} parent=1 // pred_region
      _
    $region13: #{tpu_custom_call.1} parent=1 // pred_fallthru
      _
    // Predicated region
    $region14: #{tpu_custom_call.1} parent=1 // pred_check
      _
    $region15: #{tpu_custom_call.1} parent=1 // pred_check_branch
      %18 = sbr.rel (0) target = $region17
    $region16: #{tpu_custom_call.1} parent=1 // pred_region
      _
    $region17: #{tpu_custom_call.1} parent=1 // pred_fallthru
      _
    // Predicated region
    $region18: #{tpu_custom_call.1} parent=1 // pred_check
      _
    $region19: #{tpu_custom_call.1} parent=1 // pred_check_branch
      %20 = sbr.rel (0) target = $region21
    $region20: #{tpu_custom_call.1} parent=1 // pred_region
      _
    $region21: #{tpu_custom_call.1} parent=1 // pred_fallthru
      _
    %v21 = vld [vmem:[%s0] ss:$2 sm:$0xff]
    %s22 = scalar_lea.vmem %s0, 16
    %v23 = vld [vmem:[%s22] ss:$2 sm:$0x7f]
    %v24 = vld [vmem:[%s1] sm:$0xf]
    %s25 = scalar_lea.vmem %s0, 1
    %v26 = vld [vmem:[%s25] ss:$2 sm:$0xff]
    %s27 = scalar_lea.vmem %s0, 17
    %v28 = vld [vmem:[%s27] ss:$2 sm:$0x7f]
    %v29 = vld [vmem:[%s1 + $0x4] sm:$0xf]
    %vm30 = vcmask 31744
    %v32 = vsel %vm30, %v26, 0
    %v35 = vsel %vm30, %v28, 0
    %vm37 = vcmask 1043456
    %v39 = vsel %vm37, %v29, 0
    %41 = vmatprep.subr.mxu0 0.0
    %42 = vmatpush1.msra.mxu0 %v39
    %43 = vmatprep.subr.mxu0 0.0
    %44 = vmatpush1.msra.mxu0 0.0
    %45 = vmatprep.subr.mxu0 0.0
    %46 = vmatpush1.msra.mxu0 0.0
    %47 = vmatprep.subr.mxu0 0.0
    %48 = vmatpush1.msra.mxu0 0.0
    %49 = vmatprep.subr.mxu0 0.0
    %50 = vmatpush1.msra.mxu0 0.0
    %51 = vmatprep.subr.mxu0 0.0
    %52 = vmatpush1.msra.mxu0 0.0
    %53 = vmatprep.subr.mxu0 0.0
    %54 = vmatpush1.msra.mxu0 0.0
    %55 = vmatprep.subr.mxu0 0.0
    %56 = vmatpush1.msra.mxu0 0.0
    %57 = vmatprep.subr.mxu0 0.0
    %58 = vmatpush1.msra.mxu0 0.0
    %59 = vmatprep.subr.mxu0 0.0
    %60 = vmatpush1.msra.mxu0 0.0
    %61 = vmatprep.subr.mxu0 0.0
    %62 = vmatpush1.msra.mxu0 0.0
    %63 = vmatprep.subr.mxu0 0.0
    %64 = vmatpush1.msra.mxu0 0.0
    %65 = vmatprep.subr.mxu0 0.0
    %66 = vmatpush1.msra.mxu0 0.0
    %67 = vmatprep.subr.mxu0 0.0
    %68 = vmatpush1.msra.mxu0 0.0
    %69 = vmatprep.subr.mxu0 0.0
    %70 = vmatpush1.msra.mxu0 0.0
    %71 = vmatprep.subr.mxu0 0.0
    %72 = vmatpush1.msra.mxu0 0.0
    %73 = vmatprep.subr.mxu0 0.0
    %74 = vmatpush1.msra.mxu0 0.0
    %75 = vmatprep.subr.mxu0 0.0
    %76 = vmatpush1.msra.mxu0 0.0
    %77 = vmatprep.subr.mxu0 0.0
    %78 = vmatpush1.msra.mxu0 0.0
    %79 = vmatprep.subr.mxu0 0.0
    %80 = vmatpush1.msra.mxu0 0.0
    %81 = vmatprep.subr.mxu0 0.0
    %82 = vmatpush1.msra.mxu0 0.0
    %83 = vmatprep.subr.mxu0 0.0
    %84 = vmatpush1.msra.mxu0 0.0
    %85 = vmatprep.subr.mxu0 0.0
    %86 = vmatpush1.msra.mxu0 0.0
    %87 = vmatprep.subr.mxu0 0.0
    %88 = vmatpush1.msra.mxu0 0.0
    %89 = vmatprep.subr.mxu0 0.0
    %90 = vmatpush1.msra.mxu0 0.0
    %91 = vmatprep.subr.mxu0 0.0
    %92 = vmatpush1.msra.mxu0 0.0
    %93 = vmatprep.subr.mxu0 0.0
    %94 = vmatpush1.msra.mxu0 0.0
    %95 = vmatprep.subr.mxu0 0.0
    %96 = vmatpush1.msra.mxu0 0.0
    %97 = vmatprep.subr.mxu0 0.0
    %98 = vmatpush1.msra.mxu0 0.0
    %99 = vmatprep.subr.mxu0 0.0
    %100 = vmatpush1.msra.mxu0 0.0
    %101 = vmatprep.subr.mxu0 0.0
    %102 = vmatpush1.msra.mxu0 0.0
    %103 = vmatprep.subr.mxu0 0.0
    %104 = vmatpush1.msra.mxu0 0.0
    %105 = vmatprep.mubr.f32.mxu0 0.0
    %106 = vmatmul.mubr.f32.gmra.mrb[0].mxu0 %v32
    %v107 = vpop.f32.mrb[0].mxu0
    %v108 = vadd.f32 0.0, %v107
    %v109 = vpop.f32.mrb[0].mxu0
    %110 = vmatprep.mubr.f32.mxu0 0.0
    %111 = vmatmul.mubr.f32.gmra.mrb[0].mxu0 %v35
    %v112 = vpop.f32.mrb[0].mxu0
    %v113 = vadd.f32 0.0, %v112
    %v114 = vpop.f32.mrb[0].mxu0
    %115 = vdwg.mxu0
    %v117 = vsel %vm30, %v21, 0
    %v120 = vsel %vm30, %v23, 0
    %v123 = vsel %vm37, %v24, 0
    %125 = vmatprep.subr.mxu0 0.0
    %126 = vmatpush1.msra.mxu0 %v123
    %127 = vmatprep.subr.mxu0 0.0
    %128 = vmatpush1.msra.mxu0 0.0
    %129 = vmatprep.subr.mxu0 0.0
    %130 = vmatpush1.msra.mxu0 0.0
    %131 = vmatprep.subr.mxu0 0.0
    %132 = vmatpush1.msra.mxu0 0.0
    %133 = vmatprep.subr.mxu0 0.0
    %134 = vmatpush1.msra.mxu0 0.0
    %135 = vmatprep.subr.mxu0 0.0
    %136 = vmatpush1.msra.mxu0 0.0
    %137 = vmatprep.subr.mxu0 0.0
    %138 = vmatpush1.msra.mxu0 0.0
    %139 = vmatprep.subr.mxu0 0.0
    %140 = vmatpush1.msra.mxu0 0.0
    %141 = vmatprep.subr.mxu0 0.0
    %142 = vmatpush1.msra.mxu0 0.0
    %143 = vmatprep.subr.mxu0 0.0
    %144 = vmatpush1.msra.mxu0 0.0
    %145 = vmatprep.subr.mxu0 0.0
    %146 = vmatpush1.msra.mxu0 0.0
    %147 = vmatprep.subr.mxu0 0.0
    %148 = vmatpush1.msra.mxu0 0.0
    %149 = vmatprep.subr.mxu0 0.0
    %150 = vmatpush1.msra.mxu0 0.0
    %151 = vmatprep.subr.mxu0 0.0
    %152 = vmatpush1.msra.mxu0 0.0
    %153 = vmatprep.subr.mxu0 0.0
    %154 = vmatpush1.msra.mxu0 0.0
    %155 = vmatprep.subr.mxu0 0.0
    %156 = vmatpush1.msra.mxu0 0.0
    %157 = vmatprep.subr.mxu0 0.0
    %158 = vmatpush1.msra.mxu0 0.0
    %159 = vmatprep.subr.mxu0 0.0
    %160 = vmatpush1.msra.mxu0 0.0
    %161 = vmatprep.subr.mxu0 0.0
    %162 = vmatpush1.msra.mxu0 0.0
    %163 = vmatprep.subr.mxu0 0.0
    %164 = vmatpush1.msra.mxu0 0.0
    %165 = vmatprep.subr.mxu0 0.0
    %166 = vmatpush1.msra.mxu0 0.0
    %167 = vmatprep.subr.mxu0 0.0
    %168 = vmatpush1.msra.mxu0 0.0
    %169 = vmatprep.subr.mxu0 0.0
    %170 = vmatpush1.msra.mxu0 0.0
    %171 = vmatprep.subr.mxu0 0.0
    %172 = vmatpush1.msra.mxu0 0.0
    %173 = vmatprep.subr.mxu0 0.0
    %174 = vmatpush1.msra.mxu0 0.0
    %175 = vmatprep.subr.mxu0 0.0
    %176 = vmatpush1.msra.mxu0 0.0
    %177 = vmatprep.subr.mxu0 0.0
    %178 = vmatpush1.msra.mxu0 0.0
    %179 = vmatprep.subr.mxu0 0.0
    %180 = vmatpush1.msra.mxu0 0.0
    %181 = vmatprep.subr.mxu0 0.0
    %182 = vmatpush1.msra.mxu0 0.0
    %183 = vmatprep.subr.mxu0 0.0
    %184 = vmatpush1.msra.mxu0 0.0
    %185 = vmatprep.subr.mxu0 0.0
    %186 = vmatpush1.msra.mxu0 0.0
    %187 = vmatprep.subr.mxu0 0.0
    %188 = vmatpush1.msra.mxu0 0.0
    %189 = vmatprep.mubr.f32.mxu0 0.0
    %190 = vmatmul.mubr.f32.gmra.mrb[0].mxu0 %v117
    %v191 = vpop.f32.mrb[0].mxu0
    %v192 = vadd.f32 %v108, %v191
    %v193 = vpop.f32.mrb[0].mxu0
    %194 = vmatprep.mubr.f32.mxu0 0.0
    %195 = vmatmul.mubr.f32.gmra.mrb[0].mxu0 %v120
    %v196 = vpop.f32.mrb[0].mxu0
    %v197 = vadd.f32 %v113, %v196
    %v198 = vpop.f32.mrb[0].mxu0
    %199 = vdwg.mxu0
    %s200 = scalar_lea.vmem %s0, 2
    %v201 = vld [vmem:[%s200] ss:$2 sm:$0xff]
    %s202 = scalar_lea.vmem %s0, 18
    %v203 = vld [vmem:[%s202] ss:$2 sm:$0x7f]
    %v204 = vld [vmem:[%s1 + $0x8] sm:$0xf]
    %v206 = vsel %vm30, %v201, 0
    %v209 = vsel %vm30, %v203, 0
    %v212 = vsel %vm37, %v204, 0
    %214 = vmatprep.subr.mxu0 0.0
    %215 = vmatpush1.msra.mxu0 %v212
    %216 = vmatprep.subr.mxu0 0.0
    %217 = vmatpush1.msra.mxu0 0.0
    %218 = vmatprep.subr.mxu0 0.0
    %219 = vmatpush1.msra.mxu0 0.0
    %220 = vmatprep.subr.mxu0 0.0
    %221 = vmatpush1.msra.mxu0 0.0
    %222 = vmatprep.subr.mxu0 0.0
    %223 = vmatpush1.msra.mxu0 0.0
    %224 = vmatprep.subr.mxu0 0.0
    %225 = vmatpush1.msra.mxu0 0.0
    %226 = vmatprep.subr.mxu0 0.0
    %227 = vmatpush1.msra.mxu0 0.0
    %228 = vmatprep.subr.mxu0 0.0
    %229 = vmatpush1.msra.mxu0 0.0
    %230 = vmatprep.subr.mxu0 0.0
    %231 = vmatpush1.msra.mxu0 0.0
    %232 = vmatprep.subr.mxu0 0.0
    %233 = vmatpush1.msra.mxu0 0.0
    %234 = vmatprep.subr.mxu0 0.0
    %235 = vmatpush1.msra.mxu0 0.0
    %236 = vmatprep.subr.mxu0 0.0
    %237 = vmatpush1.msra.mxu0 0.0
    %238 = vmatprep.subr.mxu0 0.0
    %239 = vmatpush1.msra.mxu0 0.0
    %240 = vmatprep.subr.mxu0 0.0
    %241 = vmatpush1.msra.mxu0 0.0
    %242 = vmatprep.subr.mxu0 0.0
    %243 = vmatpush1.msra.mxu0 0.0
    %244 = vmatprep.subr.mxu0 0.0
    %245 = vmatpush1.msra.mxu0 0.0
    %246 = vmatprep.subr.mxu0 0.0
    %247 = vmatpush1.msra.mxu0 0.0
    %248 = vmatprep.subr.mxu0 0.0
    %249 = vmatpush1.msra.mxu0 0.0
    %250 = vmatprep.subr.mxu0 0.0
    %251 = vmatpush1.msra.mxu0 0.0
    %252 = vmatprep.subr.mxu0 0.0
    %253 = vmatpush1.msra.mxu0 0.0
    %254 = vmatprep.subr.mxu0 0.0
    %255 = vmatpush1.msra.mxu0 0.0
    %256 = vmatprep.subr.mxu0 0.0
    %257 = vmatpush1.msra.mxu0 0.0
    %258 = vmatprep.subr.mxu0 0.0
    %259 = vmatpush1.msra.mxu0 0.0
    %260 = vmatprep.subr.mxu0 0.0
    %261 = vmatpush1.msra.mxu0 0.0
    %262 = vmatprep.subr.mxu0 0.0
    %263 = vmatpush1.msra.mxu0 0.0
    %264 = vmatprep.subr.mxu0 0.0
    %265 = vmatpush1.msra.mxu0 0.0
    %266 = vmatprep.subr.mxu0 0.0
    %267 = vmatpush1.msra.mxu0 0.0
    %268 = vmatprep.subr.mxu0 0.0
    %269 = vmatpush1.msra.mxu0 0.0
    %270 = vmatprep.subr.mxu0 0.0
    %271 = vmatpush1.msra.mxu0 0.0
    %272 = vmatprep.subr.mxu0 0.0
    %273 = vmatpush1.msra.mxu0 0.0
    %274 = vmatprep.subr.mxu0 0.0
    %275 = vmatpush1.msra.mxu0 0.0
    %276 = vmatprep.subr.mxu0 0.0
    %277 = vmatpush1.msra.mxu0 0.0
    %278 = vmatprep.mubr.f32.mxu0 0.0
    %279 = vmatmul.mubr.f32.gmra.mrb[0].mxu0 %v206
    %v280 = vpop.f32.mrb[0].mxu0
    %v281 = vadd.f32 0.0, %v280
    %v282 = vpop.f32.mrb[0].mxu0
    %283 = vmatprep.mubr.f32.mxu0 0.0
    %284 = vmatmul.mubr.f32.gmra.mrb[0].mxu0 %v209
    %v285 = vpop.f32.mrb[0].mxu0
    %v286 = vadd.f32 0.0, %v285
    %v287 = vpop.f32.mrb[0].mxu0
    %288 = vdwg.mxu0
    %v289 = vadd.f32 %v192, %v281
    %v290 = vadd.f32 %v197, %v286
    %291 = vmatprep.subr.mxu0 0.0
    %292 = vmatpush1.msra.mxu0 %v39
    %293 = vmatprep.subr.mxu0 0.0
    %294 = vmatpush1.msra.mxu0 0.0
    %295 = vmatprep.subr.mxu0 0.0
    %296 = vmatpush1.msra.mxu0 0.0
    %297 = vmatprep.subr.mxu0 0.0
    %298 = vmatpush1.msra.mxu0 0.0
    %299 = vmatprep.subr.mxu0 0.0
    %300 = vmatpush1.msra.mxu0 0.0
    %301 = vmatprep.subr.mxu0 0.0
    %302 = vmatpush1.msra.mxu0 0.0
    %303 = vmatprep.subr.mxu0 0.0
    %304 = vmatpush1.msra.mxu0 0.0
    %305 = vmatprep.subr.mxu0 0.0
    %306 = vmatpush1.msra.mxu0 0.0
    %307 = vmatprep.subr.mxu0 0.0
    %308 = vmatpush1.msra.mxu0 0.0
    %309 = vmatprep.subr.mxu0 0.0
    %310 = vmatpush1.msra.mxu0 0.0
    %311 = vmatprep.subr.mxu0 0.0
    %312 = vmatpush1.msra.mxu0 0.0
    %313 = vmatprep.subr.mxu0 0.0
    %314 = vmatpush1.msra.mxu0 0.0
    %315 = vmatprep.subr.mxu0 0.0
    %316 = vmatpush1.msra.mxu0 0.0
    %317 = vmatprep.subr.mxu0 0.0
    %318 = vmatpush1.msra.mxu0 0.0
    %319 = vmatprep.subr.mxu0 0.0
    %320 = vmatpush1.msra.mxu0 0.0
    %321 = vmatprep.subr.mxu0 0.0
    %322 = vmatpush1.msra.mxu0 0.0
    %323 = vmatprep.subr.mxu0 0.0
    %324 = vmatpush1.msra.mxu0 0.0
    %325 = vmatprep.subr.mxu0 0.0
    %326 = vmatpush1.msra.mxu0 0.0
    %327 = vmatprep.subr.mxu0 0.0
    %328 = vmatpush1.msra.mxu0 0.0
    %329 = vmatprep.subr.mxu0 0.0
    %330 = vmatpush1.msra.mxu0 0.0
    %331 = vmatprep.subr.mxu0 0.0
    %332 = vmatpush1.msra.mxu0 0.0
    %333 = vmatprep.subr.mxu0 0.0
    %334 = vmatpush1.msra.mxu0 0.0
    %335 = vmatprep.subr.mxu0 0.0
    %336 = vmatpush1.msra.mxu0 0.0
    %337 = vmatprep.subr.mxu0 0.0
    %338 = vmatpush1.msra.mxu0 0.0
    %339 = vmatprep.subr.mxu0 0.0
    %340 = vmatpush1.msra.mxu0 0.0
    %341 = vmatprep.subr.mxu0 0.0
    %342 = vmatpush1.msra.mxu0 0.0
    %343 = vmatprep.subr.mxu0 0.0
    %344 = vmatpush1.msra.mxu0 0.0
    %345 = vmatprep.subr.mxu0 0.0
    %346 = vmatpush1.msra.mxu0 0.0
    %347 = vmatprep.subr.mxu0 0.0
    %348 = vmatpush1.msra.mxu0 0.0
    %349 = vmatprep.subr.mxu0 0.0
    %350 = vmatpush1.msra.mxu0 0.0
    %351 = vmatprep.subr.mxu0 0.0
    %352 = vmatpush1.msra.mxu0 0.0
    %353 = vmatprep.subr.mxu0 0.0
    %354 = vmatpush1.msra.mxu0 0.0
    %355 = vmatprep.mubr.f32.mxu0 0.0
    %356 = vmatmul.mubr.f32.gmra.mrb[0].mxu0 %v206
    %v357 = vpop.f32.mrb[0].mxu0
    %v358 = vadd.f32 0.0, %v357
    %v359 = vpop.f32.mrb[0].mxu0
    %360 = vmatprep.mubr.f32.mxu0 0.0
    %361 = vmatmul.mubr.f32.gmra.mrb[0].mxu0 %v209
    %v362 = vpop.f32.mrb[0].mxu0
    %v363 = vadd.f32 0.0, %v362
    %v364 = vpop.f32.mrb[0].mxu0
    %365 = vdwg.mxu0
    %366 = vmatprep.subr.mxu0 0.0
    %367 = vmatpush1.msra.mxu0 %v123
    %368 = vmatprep.subr.mxu0 0.0
    %369 = vmatpush1.msra.mxu0 0.0
    %370 = vmatprep.subr.mxu0 0.0
    %371 = vmatpush1.msra.mxu0 0.0
    %372 = vmatprep.subr.mxu0 0.0
    %373 = vmatpush1.msra.mxu0 0.0
    %374 = vmatprep.subr.mxu0 0.0
    %375 = vmatpush1.msra.mxu0 0.0
    %376 = vmatprep.subr.mxu0 0.0
    %377 = vmatpush1.msra.mxu0 0.0
    %378 = vmatprep.subr.mxu0 0.0
    %379 = vmatpush1.msra.mxu0 0.0
    %380 = vmatprep.subr.mxu0 0.0
    %381 = vmatpush1.msra.mxu0 0.0
    %382 = vmatprep.subr.mxu0 0.0
    %383 = vmatpush1.msra.mxu0 0.0
    %384 = vmatprep.subr.mxu0 0.0
    %385 = vmatpush1.msra.mxu0 0.0
    %386 = vmatprep.subr.mxu0 0.0
    %387 = vmatpush1.msra.mxu0 0.0
    %388 = vmatprep.subr.mxu0 0.0
    %389 = vmatpush1.msra.mxu0 0.0
    %390 = vmatprep.subr.mxu0 0.0
    %391 = vmatpush1.msra.mxu0 0.0
    %392 = vmatprep.subr.mxu0 0.0
    %393 = vmatpush1.msra.mxu0 0.0
    %394 = vmatprep.subr.mxu0 0.0
    %395 = vmatpush1.msra.mxu0 0.0
    %396 = vmatprep.subr.mxu0 0.0
    %397 = vmatpush1.msra.mxu0 0.0
    %398 = vmatprep.subr.mxu0 0.0
    %399 = vmatpush1.msra.mxu0 0.0
    %400 = vmatprep.subr.mxu0 0.0
    %401 = vmatpush1.msra.mxu0 0.0
    %402 = vmatprep.subr.mxu0 0.0
    %403 = vmatpush1.msra.mxu0 0.0
    %404 = vmatprep.subr.mxu0 0.0
    %405 = vmatpush1.msra.mxu0 0.0
    %406 = vmatprep.subr.mxu0 0.0
    %407 = vmatpush1.msra.mxu0 0.0
    %408 = vmatprep.subr.mxu0 0.0
    %409 = vmatpush1.msra.mxu0 0.0
    %410 = vmatprep.subr.mxu0 0.0
    %411 = vmatpush1.msra.mxu0 0.0
    %412 = vmatprep.subr.mxu0 0.0
    %413 = vmatpush1.msra.mxu0 0.0
    %414 = vmatprep.subr.mxu0 0.0
    %415 = vmatpush1.msra.mxu0 0.0
    %416 = vmatprep.subr.mxu0 0.0
    %417 = vmatpush1.msra.mxu0 0.0
    %418 = vmatprep.subr.mxu0 0.0
    %419 = vmatpush1.msra.mxu0 0.0
    %420 = vmatprep.subr.mxu0 0.0
    %421 = vmatpush1.msra.mxu0 0.0
    %422 = vmatprep.subr.mxu0 0.0
    %423 = vmatpush1.msra.mxu0 0.0
    %424 = vmatprep.subr.mxu0 0.0
    %425 = vmatpush1.msra.mxu0 0.0
    %426 = vmatprep.subr.mxu0 0.0
    %427 = vmatpush1.msra.mxu0 0.0
    %428 = vmatprep.subr.mxu0 0.0
    %429 = vmatpush1.msra.mxu0 0.0
    %430 = vmatprep.mubr.f32.mxu0 0.0
    %431 = vmatmul.mubr.f32.gmra.mrb[0].mxu0 %v32
    %v432 = vpop.f32.mrb[0].mxu0
    %v433 = vadd.f32 %v358, %v432
    %v434 = vpop.f32.mrb[0].mxu0
    %435 = vmatprep.mubr.f32.mxu0 0.0
    %436 = vmatmul.mubr.f32.gmra.mrb[0].mxu0 %v35
    %v437 = vpop.f32.mrb[0].mxu0
    %v438 = vadd.f32 %v363, %v437
    %v439 = vpop.f32.mrb[0].mxu0
    %440 = vdwg.mxu0
    %s441 = scalar_lea.vmem %s0, 3
    %v442 = vld [vmem:[%s441] ss:$2 sm:$0xff]
    %s443 = scalar_lea.vmem %s0, 19
    %v444 = vld [vmem:[%s443] ss:$2 sm:$0x7f]
    %v446 = vsel %vm30, %v442, 0
    %v449 = vsel %vm30, %v444, 0
    %451 = vmatprep.subr.mxu0 0.0
    %452 = vmatpush1.msra.mxu0 %v212
    %453 = vmatprep.subr.mxu0 0.0
    %454 = vmatpush1.msra.mxu0 0.0
    %455 = vmatprep.subr.mxu0 0.0
    %456 = vmatpush1.msra.mxu0 0.0
    %457 = vmatprep.subr.mxu0 0.0
    %458 = vmatpush1.msra.mxu0 0.0
    %459 = vmatprep.subr.mxu0 0.0
    %460 = vmatpush1.msra.mxu0 0.0
    %461 = vmatprep.subr.mxu0 0.0
    %462 = vmatpush1.msra.mxu0 0.0
    %463 = vmatprep.subr.mxu0 0.0
    %464 = vmatpush1.msra.mxu0 0.0
    %465 = vmatprep.subr.mxu0 0.0
    %466 = vmatpush1.msra.mxu0 0.0
    %467 = vmatprep.subr.mxu0 0.0
    %468 = vmatpush1.msra.mxu0 0.0
    %469 = vmatprep.subr.mxu0 0.0
    %470 = vmatpush1.msra.mxu0 0.0
    %471 = vmatprep.subr.mxu0 0.0
    %472 = vmatpush1.msra.mxu0 0.0
    %473 = vmatprep.subr.mxu0 0.0
    %474 = vmatpush1.msra.mxu0 0.0
    %475 = vmatprep.subr.mxu0 0.0
    %476 = vmatpush1.msra.mxu0 0.0
    %477 = vmatprep.subr.mxu0 0.0
    %478 = vmatpush1.msra.mxu0 0.0
    %479 = vmatprep.subr.mxu0 0.0
    %480 = vmatpush1.msra.mxu0 0.0
    %481 = vmatprep.subr.mxu0 0.0
    %482 = vmatpush1.msra.mxu0 0.0
    %483 = vmatprep.subr.mxu0 0.0
    %484 = vmatpush1.msra.mxu0 0.0
    %485 = vmatprep.subr.mxu0 0.0
    %486 = vmatpush1.msra.mxu0 0.0
    %487 = vmatprep.subr.mxu0 0.0
    %488 = vmatpush1.msra.mxu0 0.0
    %489 = vmatprep.subr.mxu0 0.0
    %490 = vmatpush1.msra.mxu0 0.0
    %491 = vmatprep.subr.mxu0 0.0
    %492 = vmatpush1.msra.mxu0 0.0
    %493 = vmatprep.subr.mxu0 0.0
    %494 = vmatpush1.msra.mxu0 0.0
    %495 = vmatprep.subr.mxu0 0.0
    %496 = vmatpush1.msra.mxu0 0.0
    %497 = vmatprep.subr.mxu0 0.0
    %498 = vmatpush1.msra.mxu0 0.0
    %499 = vmatprep.subr.mxu0 0.0
    %500 = vmatpush1.msra.mxu0 0.0
    %501 = vmatprep.subr.mxu0 0.0
    %502 = vmatpush1.msra.mxu0 0.0
    %503 = vmatprep.subr.mxu0 0.0
    %504 = vmatpush1.msra.mxu0 0.0
    %505 = vmatprep.subr.mxu0 0.0
    %506 = vmatpush1.msra.mxu0 0.0
    %507 = vmatprep.subr.mxu0 0.0
    %508 = vmatpush1.msra.mxu0 0.0
    %509 = vmatprep.subr.mxu0 0.0
    %510 = vmatpush1.msra.mxu0 0.0
    %511 = vmatprep.subr.mxu0 0.0
    %512 = vmatpush1.msra.mxu0 0.0
    %513 = vmatprep.subr.mxu0 0.0
    %514 = vmatpush1.msra.mxu0 0.0
    %515 = vmatprep.mubr.f32.mxu0 0.0
    %516 = vmatmul.mubr.f32.gmra.mrb[0].mxu0 %v446
    %v517 = vpop.f32.mrb[0].mxu0
    %v518 = vadd.f32 0.0, %v517
    %v519 = vpop.f32.mrb[0].mxu0
    %520 = vmatprep.mubr.f32.mxu0 0.0
    %521 = vmatmul.mubr.f32.gmra.mrb[0].mxu0 %v449
    %v522 = vpop.f32.mrb[0].mxu0
    %v523 = vadd.f32 0.0, %v522
    %v524 = vpop.f32.mrb[0].mxu0
    %525 = vdwg.mxu0
    %v526 = vadd.f32 %v433, %v518
    %v527 = vadd.f32 %v438, %v523
    %v528 = vmax.f32 %v289, %v526
    %v529 = vmax.f32 %v290, %v527
    %v530 = vmax.f32 %v528, 0.0
    %v531 = vmax.f32 %v529, 0.0
    %v532 = vld [vmem:[%s2] sm:$0xff]
    %v533 = vld [vmem:[%s2 + $0x8] sm:$0xff]
    %vm536 = vcmask 1046528
    %v537 = vrot.slane %v530, 1
    %v538 = vrot.slane %v531, 1
    %v539 = vsel %vm536, %v537, %v538
    %vm540 = vcmask 64512
    %v541 = vsel %vm540, %v539, 0
    %v543 = vsel %vm540, %v538, 0
    %545 = vmatprep.subr.mxu0 0.0
    %546 = vmatpush1.msra.mxu0 %v533
    %547 = vmatprep.subr.mxu0 0.0
    %548 = vmatpush1.msra.mxu0 0.0
    %549 = vmatprep.subr.mxu0 0.0
    %550 = vmatpush1.msra.mxu0 0.0
    %551 = vmatprep.subr.mxu0 0.0
    %552 = vmatpush1.msra.mxu0 0.0
    %553 = vmatprep.subr.mxu0 0.0
    %554 = vmatpush1.msra.mxu0 0.0
    %555 = vmatprep.subr.mxu0 0.0
    %556 = vmatpush1.msra.mxu0 0.0
    %557 = vmatprep.subr.mxu0 0.0
    %558 = vmatpush1.msra.mxu0 0.0
    %559 = vmatprep.subr.mxu0 0.0
    %560 = vmatpush1.msra.mxu0 0.0
    %561 = vmatprep.subr.mxu0 0.0
    %562 = vmatpush1.msra.mxu0 0.0
    %563 = vmatprep.subr.mxu0 0.0
    %564 = vmatpush1.msra.mxu0 0.0
    %565 = vmatprep.subr.mxu0 0.0
    %566 = vmatpush1.msra.mxu0 0.0
    %567 = vmatprep.subr.mxu0 0.0
    %568 = vmatpush1.msra.mxu0 0.0
    %569 = vmatprep.subr.mxu0 0.0
    %570 = vmatpush1.msra.mxu0 0.0
    %571 = vmatprep.subr.mxu0 0.0
    %572 = vmatpush1.msra.mxu0 0.0
    %573 = vmatprep.subr.mxu0 0.0
    %574 = vmatpush1.msra.mxu0 0.0
    %575 = vmatprep.subr.mxu0 0.0
    %576 = vmatpush1.msra.mxu0 0.0
    %577 = vmatprep.subr.mxu0 0.0
    %578 = vmatpush1.msra.mxu0 0.0
    %579 = vmatprep.subr.mxu0 0.0
    %580 = vmatpush1.msra.mxu0 0.0
    %581 = vmatprep.subr.mxu0 0.0
    %582 = vmatpush1.msra.mxu0 0.0
    %583 = vmatprep.subr.mxu0 0.0
    %584 = vmatpush1.msra.mxu0 0.0
    %585 = vmatprep.subr.mxu0 0.0
    %586 = vmatpush1.msra.mxu0 0.0
    %587 = vmatprep.subr.mxu0 0.0
    %588 = vmatpush1.msra.mxu0 0.0
    %589 = vmatprep.subr.mxu0 0.0
    %590 = vmatpush1.msra.mxu0 0.0
    %591 = vmatprep.subr.mxu0 0.0
    %592 = vmatpush1.msra.mxu0 0.0
    %593 = vmatprep.subr.mxu0 0.0
    %594 = vmatpush1.msra.mxu0 0.0
    %595 = vmatprep.subr.mxu0 0.0
    %596 = vmatpush1.msra.mxu0 0.0
    %597 = vmatprep.subr.mxu0 0.0
    %598 = vmatpush1.msra.mxu0 0.0
    %599 = vmatprep.subr.mxu0 0.0
    %600 = vmatpush1.msra.mxu0 0.0
    %601 = vmatprep.subr.mxu0 0.0
    %602 = vmatpush1.msra.mxu0 0.0
    %603 = vmatprep.subr.mxu0 0.0
    %604 = vmatpush1.msra.mxu0 0.0
    %605 = vmatprep.subr.mxu0 0.0
    %606 = vmatpush1.msra.mxu0 0.0
    %607 = vmatprep.subr.mxu0 0.0
    %608 = vmatpush1.msra.mxu0 0.0
    %609 = vmatprep.mubr.f32.mxu0 0.0
    %610 = vmatmul.mubr.f32.gmra.mrb[0].mxu0 %v541
    %v611 = vpop.f32.mrb[0].mxu0
    %v612 = vadd.f32 0.0, %v611
    %v613 = vpop.f32.mrb[0].mxu0
    %614 = vmatprep.mubr.f32.mxu0 0.0
    %615 = vmatmul.mubr.f32.gmra.mrb[0].mxu0 %v543
    %v616 = vpop.f32.mrb[0].mxu0
    %v617 = vadd.f32 0.0, %v616
    %v618 = vpop.f32.mrb[0].mxu0
    %619 = vdwg.mxu0
    %v620 = vsel %vm540, %v530, 0
    %v622 = vsel %vm540, %v531, 0
    %624 = vmatprep.subr.mxu0 0.0
    %625 = vmatpush1.msra.mxu0 %v532
    %626 = vmatprep.subr.mxu0 0.0
    %627 = vmatpush1.msra.mxu0 0.0
    %628 = vmatprep.subr.mxu0 0.0
    %629 = vmatpush1.msra.mxu0 0.0
    %630 = vmatprep.subr.mxu0 0.0
    %631 = vmatpush1.msra.mxu0 0.0
    %632 = vmatprep.subr.mxu0 0.0
    %633 = vmatpush1.msra.mxu0 0.0
    %634 = vmatprep.subr.mxu0 0.0
    %635 = vmatpush1.msra.mxu0 0.0
    %636 = vmatprep.subr.mxu0 0.0
    %637 = vmatpush1.msra.mxu0 0.0
    %638 = vmatprep.subr.mxu0 0.0
    %639 = vmatpush1.msra.mxu0 0.0
    %640 = vmatprep.subr.mxu0 0.0
    %641 = vmatpush1.msra.mxu0 0.0
    %642 = vmatprep.subr.mxu0 0.0
    %643 = vmatpush1.msra.mxu0 0.0
    %644 = vmatprep.subr.mxu0 0.0
    %645 = vmatpush1.msra.mxu0 0.0
    %646 = vmatprep.subr.mxu0 0.0
    %647 = vmatpush1.msra.mxu0 0.0
    %648 = vmatprep.subr.mxu0 0.0
    %649 = vmatpush1.msra.mxu0 0.0
    %650 = vmatprep.subr.mxu0 0.0
    %651 = vmatpush1.msra.mxu0 0.0
    %652 = vmatprep.subr.mxu0 0.0
    %653 = vmatpush1.msra.mxu0 0.0
    %654 = vmatprep.subr.mxu0 0.0
    %655 = vmatpush1.msra.mxu0 0.0
    %656 = vmatprep.subr.mxu0 0.0
    %657 = vmatpush1.msra.mxu0 0.0
    %658 = vmatprep.subr.mxu0 0.0
    %659 = vmatpush1.msra.mxu0 0.0
    %660 = vmatprep.subr.mxu0 0.0
    %661 = vmatpush1.msra.mxu0 0.0
    %662 = vmatprep.subr.mxu0 0.0
    %663 = vmatpush1.msra.mxu0 0.0
    %664 = vmatprep.subr.mxu0 0.0
    %665 = vmatpush1.msra.mxu0 0.0
    %666 = vmatprep.subr.mxu0 0.0
    %667 = vmatpush1.msra.mxu0 0.0
    %668 = vmatprep.subr.mxu0 0.0
    %669 = vmatpush1.msra.mxu0 0.0
    %670 = vmatprep.subr.mxu0 0.0
    %671 = vmatpush1.msra.mxu0 0.0
    %672 = vmatprep.subr.mxu0 0.0
    %673 = vmatpush1.msra.mxu0 0.0
    %674 = vmatprep.subr.mxu0 0.0
    %675 = vmatpush1.msra.mxu0 0.0
    %676 = vmatprep.subr.mxu0 0.0
    %677 = vmatpush1.msra.mxu0 0.0
    %678 = vmatprep.subr.mxu0 0.0
    %679 = vmatpush1.msra.mxu0 0.0
    %680 = vmatprep.subr.mxu0 0.0
    %681 = vmatpush1.msra.mxu0 0.0
    %682 = vmatprep.subr.mxu0 0.0
    %683 = vmatpush1.msra.mxu0 0.0
    %684 = vmatprep.subr.mxu0 0.0
    %685 = vmatpush1.msra.mxu0 0.0
    %686 = vmatprep.subr.mxu0 0.0
    %687 = vmatpush1.msra.mxu0 0.0
    %688 = vmatprep.mubr.f32.mxu0 0.0
    %689 = vmatmul.mubr.f32.gmra.mrb[0].mxu0 %v620
    %v690 = vpop.f32.mrb[0].mxu0
    %v691 = vadd.f32 %v612, %v690
    %v692 = vpop.f32.mrb[0].mxu0
    %693 = vmatprep.mubr.f32.mxu0 0.0
    %694 = vmatmul.mubr.f32.gmra.mrb[0].mxu0 %v622
    %v695 = vpop.f32.mrb[0].mxu0
    %v696 = vadd.f32 %v617, %v695
    %v697 = vpop.f32.mrb[0].mxu0
    %698 = vdwg.mxu0
    %v699 = vld [vmem:[%s2 + $0x10] sm:$0xff]
    %vm700 = vcmask 1045504
    %v701 = vrot.slane %v530, 2
    %v702 = vrot.slane %v531, 2
    %v703 = vsel %vm700, %v701, %v702
    %v704 = vsel %vm540, %v703, 0
    %v706 = vsel %vm540, %v702, 0
    %708 = vmatprep.subr.mxu0 0.0
    %709 = vmatpush1.msra.mxu0 %v699
    %710 = vmatprep.subr.mxu0 0.0
    %711 = vmatpush1.msra.mxu0 0.0
    %712 = vmatprep.subr.mxu0 0.0
    %713 = vmatpush1.msra.mxu0 0.0
    %714 = vmatprep.subr.mxu0 0.0
    %715 = vmatpush1.msra.mxu0 0.0
    %716 = vmatprep.subr.mxu0 0.0
    %717 = vmatpush1.msra.mxu0 0.0
    %718 = vmatprep.subr.mxu0 0.0
    %719 = vmatpush1.msra.mxu0 0.0
    %720 = vmatprep.subr.mxu0 0.0
    %721 = vmatpush1.msra.mxu0 0.0
    %722 = vmatprep.subr.mxu0 0.0
    %723 = vmatpush1.msra.mxu0 0.0
    %724 = vmatprep.subr.mxu0 0.0
    %725 = vmatpush1.msra.mxu0 0.0
    %726 = vmatprep.subr.mxu0 0.0
    %727 = vmatpush1.msra.mxu0 0.0
    %728 = vmatprep.subr.mxu0 0.0
    %729 = vmatpush1.msra.mxu0 0.0
    %730 = vmatprep.subr.mxu0 0.0
    %731 = vmatpush1.msra.mxu0 0.0
    %732 = vmatprep.subr.mxu0 0.0
    %733 = vmatpush1.msra.mxu0 0.0
    %734 = vmatprep.subr.mxu0 0.0
    %735 = vmatpush1.msra.mxu0 0.0
    %736 = vmatprep.subr.mxu0 0.0
    %737 = vmatpush1.msra.mxu0 0.0
    %738 = vmatprep.subr.mxu0 0.0
    %739 = vmatpush1.msra.mxu0 0.0
    %740 = vmatprep.subr.mxu0 0.0
    %741 = vmatpush1.msra.mxu0 0.0
    %742 = vmatprep.subr.mxu0 0.0
    %743 = vmatpush1.msra.mxu0 0.0
    %744 = vmatprep.subr.mxu0 0.0
    %745 = vmatpush1.msra.mxu0 0.0
    %746 = vmatprep.subr.mxu0 0.0
    %747 = vmatpush1.msra.mxu0 0.0
    %748 = vmatprep.subr.mxu0 0.0
    %749 = vmatpush1.msra.mxu0 0.0
    %750 = vmatprep.subr.mxu0 0.0
    %751 = vmatpush1.msra.mxu0 0.0
    %752 = vmatprep.subr.mxu0 0.0
    %753 = vmatpush1.msra.mxu0 0.0
    %754 = vmatprep.subr.mxu0 0.0
    %755 = vmatpush1.msra.mxu0 0.0
    %756 = vmatprep.subr.mxu0 0.0
    %757 = vmatpush1.msra.mxu0 0.0
    %758 = vmatprep.subr.mxu0 0.0
    %759 = vmatpush1.msra.mxu0 0.0
    %760 = vmatprep.subr.mxu0 0.0
    %761 = vmatpush1.msra.mxu0 0.0
    %762 = vmatprep.subr.mxu0 0.0
    %763 = vmatpush1.msra.mxu0 0.0
    %764 = vmatprep.subr.mxu0 0.0
    %765 = vmatpush1.msra.mxu0 0.0
    %766 = vmatprep.subr.mxu0 0.0
    %767 = vmatpush1.msra.mxu0 0.0
    %768 = vmatprep.subr.mxu0 0.0
    %769 = vmatpush1.msra.mxu0 0.0
    %770 = vmatprep.subr.mxu0 0.0
    %771 = vmatpush1.msra.mxu0 0.0
    %772 = vmatprep.mubr.f32.mxu0 0.0
    %773 = vmatmul.mubr.f32.gmra.mrb[0].mxu0 %v704
    %v774 = vpop.f32.mrb[0].mxu0
    %v775 = vadd.f32 0.0, %v774
    %v776 = vpop.f32.mrb[0].mxu0
    %777 = vmatprep.mubr.f32.mxu0 0.0
    %778 = vmatmul.mubr.f32.gmra.mrb[0].mxu0 %v706
    %v779 = vpop.f32.mrb[0].mxu0
    %v780 = vadd.f32 0.0, %v779
    %v781 = vpop.f32.mrb[0].mxu0
    %782 = vdwg.mxu0
    %v783 = vadd.f32 %v691, %v775
    %v784 = vadd.f32 %v696, %v780
    %v785 = vmax.f32 %v783, 0.0
    %v786 = vmax.f32 %v784, 0.0
    %v789 = vrot.slane %v785, 1
    %v790 = vrot.slane %v786, 1
    %v791 = vsel %vm536, %v789, %v790
    %v794 = vmax.f32 %v785, %v791
    %v795 = vmax.f32 %v786, %v790
    %796 = vst.msk [vmem:[#allocation2] sm:$0xff] %vm540, %v794
    %vm797 = vcmask 60416
    %798 = vst.msk [vmem:[#allocation2 + $0x8] sm:$0xf] %vm797, %v795
    %v799 = vld [vmem:[#allocation2] ss:$8 sm:$0x3]
    %v800 = vld [vmem:[%s3] sm:$0xff]
    %s801 = scalar_lea.vmem [#allocation2], 2
    %v802 = vld [vmem:[%s801] ss:$8 sm:$0x3]
    %v803 = vld [vmem:[%s3 + $0x8] sm:$0xff]
    %v805 = vsel %vm540, %v802, 0
    %807 = vmatprep.subr.mxu0 0.0
    %808 = vmatpush1.msra.mxu0 %v803
    %809 = vmatprep.subr.mxu0 0.0
    %810 = vmatpush1.msra.mxu0 0.0
    %811 = vmatprep.subr.mxu0 0.0
    %812 = vmatpush1.msra.mxu0 0.0
    %813 = vmatprep.subr.mxu0 0.0
    %814 = vmatpush1.msra.mxu0 0.0
    %815 = vmatprep.subr.mxu0 0.0
    %816 = vmatpush1.msra.mxu0 0.0
    %817 = vmatprep.subr.mxu0 0.0
    %818 = vmatpush1.msra.mxu0 0.0
    %819 = vmatprep.subr.mxu0 0.0
    %820 = vmatpush1.msra.mxu0 0.0
    %821 = vmatprep.subr.mxu0 0.0
    %822 = vmatpush1.msra.mxu0 0.0
    %823 = vmatprep.subr.mxu0 0.0
    %824 = vmatpush1.msra.mxu0 0.0
    %825 = vmatprep.subr.mxu0 0.0
    %826 = vmatpush1.msra.mxu0 0.0
    %827 = vmatprep.subr.mxu0 0.0
    %828 = vmatpush1.msra.mxu0 0.0
    %829 = vmatprep.subr.mxu0 0.0
    %830 = vmatpush1.msra.mxu0 0.0
    %831 = vmatprep.subr.mxu0 0.0
    %832 = vmatpush1.msra.mxu0 0.0
    %833 = vmatprep.subr.mxu0 0.0
    %834 = vmatpush1.msra.mxu0 0.0
    %835 = vmatprep.subr.mxu0 0.0
    %836 = vmatpush1.msra.mxu0 0.0
    %837 = vmatprep.subr.mxu0 0.0
    %838 = vmatpush1.msra.mxu0 0.0
    %839 = vmatprep.subr.mxu0 0.0
    %840 = vmatpush1.msra.mxu0 0.0
    %841 = vmatprep.subr.mxu0 0.0
    %842 = vmatpush1.msra.mxu0 0.0
    %843 = vmatprep.subr.mxu0 0.0
    %844 = vmatpush1.msra.mxu0 0.0
    %845 = vmatprep.subr.mxu0 0.0
    %846 = vmatpush1.msra.mxu0 0.0
    %847 = vmatprep.subr.mxu0 0.0
    %848 = vmatpush1.msra.mxu0 0.0
    %849 = vmatprep.subr.mxu0 0.0
    %850 = vmatpush1.msra.mxu0 0.0
    %851 = vmatprep.subr.mxu0 0.0
    %852 = vmatpush1.msra.mxu0 0.0
    %853 = vmatprep.subr.mxu0 0.0
    %854 = vmatpush1.msra.mxu0 0.0
    %855 = vmatprep.subr.mxu0 0.0
    %856 = vmatpush1.msra.mxu0 0.0
    %857 = vmatprep.subr.mxu0 0.0
    %858 = vmatpush1.msra.mxu0 0.0
    %859 = vmatprep.subr.mxu0 0.0
    %860 = vmatpush1.msra.mxu0 0.0
    %861 = vmatprep.subr.mxu0 0.0
    %862 = vmatpush1.msra.mxu0 0.0
    %863 = vmatprep.subr.mxu0 0.0
    %864 = vmatpush1.msra.mxu0 0.0
    %865 = vmatprep.subr.mxu0 0.0
    %866 = vmatpush1.msra.mxu0 0.0
    %867 = vmatprep.subr.mxu0 0.0
    %868 = vmatpush1.msra.mxu0 0.0
    %869 = vmatprep.subr.mxu0 0.0
    %870 = vmatpush1.msra.mxu0 0.0
    %871 = vmatprep.mubr.f32.mxu0 0.0
    %872 = vmatmul.mubr.f32.gmra.mrb[0].mxu0 %v805
    %v873 = vpop.f32.mrb[0].mxu0
    %v874 = vadd.f32 0.0, %v873
    %v875 = vpop.f32.mrb[0].mxu0
    %876 = vdwg.mxu0
    %v878 = vsel %vm540, %v799, 0
    %880 = vmatprep.subr.mxu0 0.0
    %881 = vmatpush1.msra.mxu0 %v800
    %882 = vmatprep.subr.mxu0 0.0
    %883 = vmatpush1.msra.mxu0 0.0
    %884 = vmatprep.subr.mxu0 0.0
    %885 = vmatpush1.msra.mxu0 0.0
    %886 = vmatprep.subr.mxu0 0.0
    %887 = vmatpush1.msra.mxu0 0.0
    %888 = vmatprep.subr.mxu0 0.0
    %889 = vmatpush1.msra.mxu0 0.0
    %890 = vmatprep.subr.mxu0 0.0
    %891 = vmatpush1.msra.mxu0 0.0
    %892 = vmatprep.subr.mxu0 0.0
    %893 = vmatpush1.msra.mxu0 0.0
    %894 = vmatprep.subr.mxu0 0.0
    %895 = vmatpush1.msra.mxu0 0.0
    %896 = vmatprep.subr.mxu0 0.0
    %897 = vmatpush1.msra.mxu0 0.0
    %898 = vmatprep.subr.mxu0 0.0
    %899 = vmatpush1.msra.mxu0 0.0
    %900 = vmatprep.subr.mxu0 0.0
    %901 = vmatpush1.msra.mxu0 0.0
    %902 = vmatprep.subr.mxu0 0.0
    %903 = vmatpush1.msra.mxu0 0.0
    %904 = vmatprep.subr.mxu0 0.0
    %905 = vmatpush1.msra.mxu0 0.0
    %906 = vmatprep.subr.mxu0 0.0
    %907 = vmatpush1.msra.mxu0 0.0
    %908 = vmatprep.subr.mxu0 0.0
    %909 = vmatpush1.msra.mxu0 0.0
    %910 = vmatprep.subr.mxu0 0.0
    %911 = vmatpush1.msra.mxu0 0.0
    %912 = vmatprep.subr.mxu0 0.0
    %913 = vmatpush1.msra.mxu0 0.0
    %914 = vmatprep.subr.mxu0 0.0
    %915 = vmatpush1.msra.mxu0 0.0
    %916 = vmatprep.subr.mxu0 0.0
    %917 = vmatpush1.msra.mxu0 0.0
    %918 = vmatprep.subr.mxu0 0.0
    %919 = vmatpush1.msra.mxu0 0.0
    %920 = vmatprep.subr.mxu0 0.0
    %921 = vmatpush1.msra.mxu0 0.0
    %922 = vmatprep.subr.mxu0 0.0
    %923 = vmatpush1.msra.mxu0 0.0
    %924 = vmatprep.subr.mxu0 0.0
    %925 = vmatpush1.msra.mxu0 0.0
    %926 = vmatprep.subr.mxu0 0.0
    %927 = vmatpush1.msra.mxu0 0.0
    %928 = vmatprep.subr.mxu0 0.0
    %929 = vmatpush1.msra.mxu0 0.0
    %930 = vmatprep.subr.mxu0 0.0
    %931 = vmatpush1.msra.mxu0 0.0
    %932 = vmatprep.subr.mxu0 0.0
    %933 = vmatpush1.msra.mxu0 0.0
    %934 = vmatprep.subr.mxu0 0.0
    %935 = vmatpush1.msra.mxu0 0.0
    %936 = vmatprep.subr.mxu0 0.0
    %937 = vmatpush1.msra.mxu0 0.0
    %938 = vmatprep.subr.mxu0 0.0
    %939 = vmatpush1.msra.mxu0 0.0
    %940 = vmatprep.subr.mxu0 0.0
    %941 = vmatpush1.msra.mxu0 0.0
    %942 = vmatprep.subr.mxu0 0.0
    %943 = vmatpush1.msra.mxu0 0.0
    %944 = vmatprep.mubr.f32.mxu0 0.0
    %945 = vmatmul.mubr.f32.gmra.mrb[0].mxu0 %v878
    %v946 = vpop.f32.mrb[0].mxu0
    %v947 = vadd.f32 %v874, %v946
    %v948 = vpop.f32.mrb[0].mxu0
    %949 = vdwg.mxu0
    %v950 = vmax.f32 %v947, 0.0
    %v951 = vld [vmem:[%s4] sm:$0xff]
    %v952 = vld [vmem:[%s4 + $0x8] sm:$0xff]
    %v953 = vld [vmem:[%s4 + $0x10] sm:$0xff]
    %v954 = vld [vmem:[%s4 + $0x18] sm:$0xff]
    %vm955 = vcmask 261120
    %v957 = vsel %vm955, %v950, 0
    %959 = vmatprep.subr.mxu0 0.0
    %960 = vmatpush1.msra.mxu0 %v951
    %961 = vmatprep.subr.mxu0 0.0
    %962 = vmatpush1.msra.mxu0 %v952
    %963 = vmatprep.subr.mxu0 0.0
    %964 = vmatpush1.msra.mxu0 %v953
    %965 = vmatprep.subr.mxu0 0.0
    %966 = vmatpush1.msra.mxu0 %v954
    %967 = vmatprep.subr.mxu0 0.0
    %968 = vmatpush1.msra.mxu0 0.0
    %969 = vmatprep.subr.mxu0 0.0
    %970 = vmatpush1.msra.mxu0 0.0
    %971 = vmatprep.subr.mxu0 0.0
    %972 = vmatpush1.msra.mxu0 0.0
    %973 = vmatprep.subr.mxu0 0.0
    %974 = vmatpush1.msra.mxu0 0.0
    %975 = vmatprep.subr.mxu0 0.0
    %976 = vmatpush1.msra.mxu0 0.0
    %977 = vmatprep.subr.mxu0 0.0
    %978 = vmatpush1.msra.mxu0 0.0
    %979 = vmatprep.subr.mxu0 0.0
    %980 = vmatpush1.msra.mxu0 0.0
    %981 = vmatprep.subr.mxu0 0.0
    %982 = vmatpush1.msra.mxu0 0.0
    %983 = vmatprep.subr.mxu0 0.0
    %984 = vmatpush1.msra.mxu0 0.0
    %985 = vmatprep.subr.mxu0 0.0
    %986 = vmatpush1.msra.mxu0 0.0
    %987 = vmatprep.subr.mxu0 0.0
    %988 = vmatpush1.msra.mxu0 0.0
    %989 = vmatprep.subr.mxu0 0.0
    %990 = vmatpush1.msra.mxu0 0.0
    %991 = vmatprep.subr.mxu0 0.0
    %992 = vmatpush1.msra.mxu0 0.0
    %993 = vmatprep.subr.mxu0 0.0
    %994 = vmatpush1.msra.mxu0 0.0
    %995 = vmatprep.subr.mxu0 0.0
    %996 = vmatpush1.msra.mxu0 0.0
    %997 = vmatprep.subr.mxu0 0.0
    %998 = vmatpush1.msra.mxu0 0.0
    %999 = vmatprep.subr.mxu0 0.0
    %1000 = vmatpush1.msra.mxu0 0.0
    %1001 = vmatprep.subr.mxu0 0.0
    %1002 = vmatpush1.msra.mxu0 0.0
    %1003 = vmatprep.subr.mxu0 0.0
    %1004 = vmatpush1.msra.mxu0 0.0
    %1005 = vmatprep.subr.mxu0 0.0
    %1006 = vmatpush1.msra.mxu0 0.0
    %1007 = vmatprep.subr.mxu0 0.0
    %1008 = vmatpush1.msra.mxu0 0.0
    %1009 = vmatprep.subr.mxu0 0.0
    %1010 = vmatpush1.msra.mxu0 0.0
    %1011 = vmatprep.subr.mxu0 0.0
    %1012 = vmatpush1.msra.mxu0 0.0
    %1013 = vmatprep.subr.mxu0 0.0
    %1014 = vmatpush1.msra.mxu0 0.0
    %1015 = vmatprep.subr.mxu0 0.0
    %1016 = vmatpush1.msra.mxu0 0.0
    %1017 = vmatprep.subr.mxu0 0.0
    %1018 = vmatpush1.msra.mxu0 0.0
    %1019 = vmatprep.subr.mxu0 0.0
    %1020 = vmatpush1.msra.mxu0 0.0
    %1021 = vmatprep.subr.mxu0 0.0
    %1022 = vmatpush1.msra.mxu0 0.0
    %1023 = vmatprep.mubr.f32.mxu0 0.0
    %1024 = vmatmul.mubr.f32.gmra.mrb[0].mxu0 %v957
    %v1025 = vpop.f32.mrb[0].mxu0
    %v1026 = vadd.f32 0.0, %v1025
    %v1027 = vpop.f32.mrb[0].mxu0
    %1028 = vdwg.mxu0
    %vm1029 = vcmask 25600
    %1030 = vst.msk [vmem:[#allocation3] sm:$0x3] %vm1029, %v1026
    // Predicated region
    $region22: #{tpu_custom_call.1} parent=1 // pred_check
      _
    $region23: #{tpu_custom_call.1} parent=1 // pred_check_branch
      %1032 = sbr.rel (0) target = $region25
    $region24: #{tpu_custom_call.1} parent=1 // pred_region
      %s1034 = ssub.s32 32, 32
      %1035 = vsyncadd [#allocation4], %s1034
      %s1037 = sshll.u32 [#allocation3], 4
      %s1038 = int_to_ptr.vmem [resolvable:$true] %s1037
      %1040 = dma.vmem_to_hbm [thread:$0]  %s1038, 32, %s5, [#allocation4]
    $region25: #{tpu_custom_call.1} parent=1 // pred_fallthru
      _
    // Predicated region
    $region26: #{tpu_custom_call.1} parent=1 // pred_check
      _
    $region27: #{tpu_custom_call.1} parent=1 // pred_check_branch
      %1042 = sbr.rel (0) target = $region29
    $region28: #{tpu_custom_call.1} parent=1 // pred_region
      %1043 = dma.done [#allocation4], 32
    $region29: #{tpu_custom_call.1} parent=1 // pred_fallthru
      _
    %1044 = vsyncpa [#allocation4], 1

</llo_original>
